<compile_context>
chip_gen: v5e
topology: v5e:2x2
jax: 0.10.0
libtpu: 0.0.40
codegen_flags: <defaults>
</compile_context>

<pallas_src>
import jax
import jax.numpy as jnp
from jax.experimental import pallas as pl
from jax.experimental.pallas import tpu as pltpu

_LANE = 128      # vreg lane width
_SUBLANE = 8     # f32 vreg sublane count


def _round_up(n, m):
    return (n + m - 1) // m * m


def _make_fused_mlp_kernel(num_layers):
    """Fused MLP kernel.

    Ref order: x_ref, w0, b0, ..., w{L-1}, b{L-1}, o_ref
      x_ref : (TB, Din)   VMEM batch tile (true, unpadded feature dim)
      w_l   : (K_l, N_l)  VMEM, resident (constant index_map)
      b_l   : (1,  N_l)   VMEM, f32
      o_ref : (TB, Nout)  VMEM (lane-dense: Nout is a multiple of 128)
    """

    def kernel(x_ref, *refs):
        o_ref = refs[-1]
        h = x_ref[...]
        for l in range(num_layers):
            w_ref = refs[2 * l]
            b_ref = refs[2 * l + 1]
            # MXU matmul with f32 accumulation.
            acc = jnp.dot(h.astype(w_ref.dtype), w_ref[...],
                          preferred_element_type=jnp.float32)
            acc = acc + b_ref[...]                  # f32 bias add (broadcast)
            if l < num_layers - 1:
                acc = jnp.maximum(acc, 0.0)         # f32 ReLU epilogue
                # Carry the activation in the NEXT layer's weight dtype (bf16
                # when weights are bf16).  Numerically identical to casting
                # right before the next dot, but halves vreg-spill / VMEM
                # bytes for intermediates at large batch tiles.
                h = acc.astype(refs[2 * (l + 1)].dtype)
            else:
                h = acc
        o_ref[...] = h.astype(o_ref.dtype)

    return kernel


# Resolved lazily on the first call: does this JAX accept pl.Buffered(1)?
_SINGLE_BUFFER_WEIGHTS = None


def _const_block_spec(shape, single_buffer):
    """Whole-array BlockSpec with a constant index_map (VMEM-resident)."""
    index_map = lambda i: (0,) * len(shape)
    if single_buffer and hasattr(pl, "Buffered"):
        try:
            # Constant index_map => the second pipeline buffer is dead weight;
            # single-buffering halves the resident VMEM (key on v7x, 64 MiB).
            return pl.BlockSpec(shape, index_map, pipeline_mode=pl.Buffered(1))
        except TypeError:
            pass
    return pl.BlockSpec(shape, index_map)


def _fused_mlp_forward(x, weights, biases, out_dim, *,
                       max_batch_tile=512, slice_output=True):
    """MLP(x) computed by ONE fused Pallas kernel.

    Returns (batch, out_dim) if slice_output, otherwise the lane-padded
    (batch, Nout_padded) slab (skips the post-kernel slice HBM round trip).
    """
    global _SINGLE_BUFFER_WEIGHTS

    batch, din = x.shape
    assert din == weights[0].shape[0]
    dout_p = weights[-1].shape[1]
    num_layers = len(weights)

    # ---- batch tiling -------------------------------------------------------
    # Prefer the biggest tile (per-grid-step overhead ~0.35 us), but keep >= 2
    # grid steps when batch allows so v7x's second TensorCore gets work.
    tile_b = min(_round_up(batch, _SUBLANE), max_batch_tile)
    if batch >= 2 * _SUBLANE:
        tile_b = min(tile_b, _round_up(pl.cdiv(batch, 2), _SUBLANE))
    batch_p = _round_up(batch, tile_b)
    grid = (batch_p // tile_b,)

    # Only a batch-row pad, only when needed (never a feature-dim pad of x).
    x_p = x
    if batch_p != batch:
        x_p = jnp.zeros((batch_p, din), x.dtype).at[:batch].set(x)

    flat_params = []
    for w, b in zip(weights, biases):
        flat_params += [w, b]

    # ---- VMEM budget / cost estimate ---------------------------------------
    param_bytes = sum(int(p.size) * p.dtype.itemsize for p in flat_params)
    act_bytes = sum(tile_b * w.shape[1] * 4 for w in weights)       # f32 worst case
    io_bytes = 2 * tile_b * (din + dout_p) * x.dtype.itemsize       # double-buffered I/O
    needed = 2 * param_bytes + act_bytes + io_bytes                 # worst case
    vmem_limit = int(min(max(needed + (8 << 20), 16 << 20), 48 << 20))
    # TODO(synk): if resident params ever exceed ~24 MiB (very wide
    # decompress_dims on v7x), add a grid axis tiling the widest layer's N
    # instead of keeping every weight resident.

    cost = pl.CostEstimate(
        flops=2 * batch_p * sum(w.shape[0] * w.shape[1] for w in weights),
        transcendentals=0,
        bytes_accessed=int(x_p.size * x_p.dtype.itemsize
                           + batch_p * dout_p * x.dtype.itemsize
                           + param_bytes),
    )

    kernel = _make_fused_mlp_kernel(num_layers)
    out_shape = jax.ShapeDtypeStruct((batch_p, dout_p), x.dtype)

    def run(single_buffer):
        in_specs = [pl.BlockSpec((tile_b, din), lambda i: (i, 0))]
        for w, b in zip(weights, biases):
            in_specs.append(_const_block_spec(w.shape, single_buffer))
            in_specs.append(_const_block_spec(b.shape, single_buffer))
        return pl.pallas_call(
            kernel,
            out_shape=out_shape,
            grid=grid,
            in_specs=in_specs,
            out_specs=pl.BlockSpec((tile_b, dout_p), lambda i: (i, 0)),
            compiler_params=pltpu.CompilerParams(
                dimension_semantics=("parallel",),   # megacore sharding on v7x
                vmem_limit_bytes=vmem_limit),
            cost_estimate=cost,
        )(x_p, *flat_params)

    if _SINGLE_BUFFER_WEIGHTS is None:
        try:
            out_p = jax.block_until_ready(run(True))
            _SINGLE_BUFFER_WEIGHTS = True
        except Exception:  # pl.Buffered(1) unsupported -> default pipelining
            _SINGLE_BUFFER_WEIGHTS = False
            out_p = run(False)
    else:
        out_p = run(_SINGLE_BUFFER_WEIGHTS)

    if not slice_output:
        return out_p if batch_p == batch else out_p[:batch]
    return out_p[:batch, :out_dim]


class DecoderPallas:
    """JAX/Pallas port of the PyTorch Decoder module.

    seq   = [Linear(dim, d), ReLU() for d in decompress_dims] + [Linear(dim, data_dim)]
    sigma = Parameter(0.1 * ones(data_dim))   (returned as-is by forward)

    Layer OUTPUT dims are zero-padded to 128-lane multiples at init (not 256:
    the kernel is memory-bound and 128 tiles every MXU generation exactly);
    padded rows/cols are zero so ReLU keeps padding lanes at exactly 0 and the
    padded math equals the unpadded math.  The first layer keeps its TRUE
    input dim so x needs no feature-dim padding at call time.

    param_dtype defaults to bfloat16 (safe on v5e/v6e/v7x: the MXU is
    bf16-native, the bias+ReLU epilogue and accumulation stay f32) and halves
    weight DMA bytes and resident weight VMEM.  NOTE: the bf16 path also
    quantizes the inter-layer activations, so drift vs. a pure-f32 PyTorch
    model is larger than vs. the bf16-weight reference used in the self-check.
    Pass param_dtype=jnp.float32 for bit-faithful f32 math.
    """

    def __init__(self, embedding_dim, decompress_dims, data_dim, key,
                 param_dtype=jnp.bfloat16):
        self.data_dim = data_dim
        dims_in = [embedding_dim] + list(decompress_dims)
        dims_out = list(decompress_dims) + [data_dim]
        self.weights = []   # param_dtype; K padded to 128 except layer 0
        self.biases = []    # always f32 (f32 epilogue), shape (1, N_padded)
        for layer, (din, dout) in enumerate(zip(dims_in, dims_out)):
            key, wk, bk = jax.random.split(key, 3)
            # Deterministic synthetic init (PyTorch-Linear-like uniform scale).
            scale = 1.0 / float(din) ** 0.5
            w = jax.random.uniform(wk, (din, dout), jnp.float32, -scale, scale)
            b = jax.random.uniform(bk, (dout,), jnp.float32, -scale, scale)
            din_p = din if layer == 0 else _round_up(din, _LANE)
            dout_p = _round_up(dout, _LANE)
            w_p = jnp.zeros((din_p, dout_p), jnp.float32).at[:din, :dout].set(w)
            b_p = jnp.zeros((1, dout_p), jnp.float32).at[0, :dout].set(b)
            self.weights.append(w_p.astype(param_dtype))
            self.biases.append(b_p)
        self.sigma = jnp.ones((data_dim,), jnp.float32) * 0.1

    def __call__(self, x, *, return_padded=False):
        out = _fused_mlp_forward(x, self.weights, self.biases, self.data_dim,
                                 slice_output=not return_padded)
        return out, self.sigma


def _reference_forward(decoder, x):
    """Pure-JAX reference using the same stored (padded) parameters."""
    h = x.astype(jnp.float32)
    n = len(decoder.weights)
    for l, (w, b) in enumerate(zip(decoder.weights, decoder.biases)):
        h = jnp.dot(h.astype(w.dtype), w, preferred_element_type=jnp.float32) + b
        if l < n - 1:
            h = jnp.maximum(h, 0.0)
    return h[:, :decoder.data_dim], decoder.sigma


if __name__ == "__main__":
    key = jax.random.PRNGKey(0)
    key, xk, pk = jax.random.split(key, 3)

    batch = 16
    embedding_dim = 32
    decompress_dims = (64, 64)
    data_dim = 48

    x = jax.random.normal(xk, (batch, embedding_dim), jnp.float32)

    # --- f32 parameters: strict correctness check vs pure-JAX reference -----
    dec_f32 = DecoderPallas(embedding_dim, decompress_dims, data_dim, pk,
                            param_dtype=jnp.float32)
    out, sigma = dec_f32(x)
    out = jax.block_until_ready(out)
    sigma = jax.block_until_ready(sigma)
    ref_out, ref_sigma = _reference_forward(dec_f32, x)
    assert out.shape == (batch, data_dim)
    assert sigma.shape == (data_dim,)
    assert jnp.allclose(out, ref_out, atol=1e-5, rtol=1e-5)
    assert jnp.allclose(sigma, ref_sigma)

    # --- default (bf16 weights, f32 accumulation): looser check -------------
    # NOTE: compares against a reference using the SAME bf16 weights; drift
    # vs. a pure-f32 PyTorch model would be larger than this tolerance.
    dec_bf16 = DecoderPallas(embedding_dim, decompress_dims, data_dim, pk)
    out16, _ = dec_bf16(x)
    out16 = jax.block_until_ready(out16)
    ref16, _ = _reference_forward(dec_bf16, x)
    assert out16.shape == (batch, data_dim)
    assert jnp.allclose(out16, ref16, atol=2e-2, rtol=2e-2)

    # --- lane-padded output path (skips the post-kernel slice) --------------
    out_pad, _ = dec_bf16(x, return_padded=True)
    out_pad = jax.block_until_ready(out_pad)
    assert out_pad.shape[0] == batch and out_pad.shape[1] % _LANE == 0
    assert jnp.allclose(out_pad[:, :data_dim], ref16, atol=2e-2, rtol=2e-2)

    print("KERNEL_OK")
</pallas_src>

<mosaic_0001>
module attributes {stable_mosaic.version = 11 : i64} {
  func.func @kernel(%arg0: i32, %arg1: memref<8x32xf32, #tpu.memory_space<vmem>>, %arg2: memref<32x128xf32, #tpu.memory_space<vmem>>, %arg3: memref<1x128xf32, #tpu.memory_space<vmem>>, %arg4: memref<128x128xf32, #tpu.memory_space<vmem>>, %arg5: memref<1x128xf32, #tpu.memory_space<vmem>>, %arg6: memref<128x128xf32, #tpu.memory_space<vmem>>, %arg7: memref<1x128xf32, #tpu.memory_space<vmem>>, %arg8: memref<8x128xf32, #tpu.memory_space<vmem>>) attributes {dimension_semantics = [#tpu.dimension_semantics<parallel>], iteration_bounds = array<i64: 2>, scalar_prefetch = 0 : i64, scratch_operands = 0 : i64, tpu.core_type = #tpu.core_type<tc>, window_params = [{transform_indices = @transform_0, window_bounds = array<i64: 8, 32>}, {pipeline_mode = #tpu.pipeline_mode<synchronous>, transform_indices = @transform_1, window_bounds = array<i64: 32, 128>}, {pipeline_mode = #tpu.pipeline_mode<synchronous>, transform_indices = @transform_2, window_bounds = array<i64: 1, 128>}, {pipeline_mode = #tpu.pipeline_mode<synchronous>, transform_indices = @transform_3, window_bounds = array<i64: 128, 128>}, {pipeline_mode = #tpu.pipeline_mode<synchronous>, transform_indices = @transform_4, window_bounds = array<i64: 1, 128>}, {pipeline_mode = #tpu.pipeline_mode<synchronous>, transform_indices = @transform_5, window_bounds = array<i64: 128, 128>}, {pipeline_mode = #tpu.pipeline_mode<synchronous>, transform_indices = @transform_6, window_bounds = array<i64: 1, 128>}, {transform_indices = @transform_7, window_bounds = array<i64: 8, 128>}]} {
    %c0 = arith.constant 0 : index
    %c0_0 = arith.constant 0 : index
    %0 = vector.load %arg1[%c0, %c0_0] : memref<8x32xf32, #tpu.memory_space<vmem>>, vector<8x32xf32>
    %c0_1 = arith.constant 0 : index
    %c0_2 = arith.constant 0 : index
    %1 = vector.load %arg2[%c0_1, %c0_2] : memref<32x128xf32, #tpu.memory_space<vmem>>, vector<32x128xf32>
    %cst = arith.constant dense<0.000000e+00> : vector<8x128xf32>
    %2 = tpu.matmul %0, %1, %cst {dimension_numbers = #tpu.dot_dimension_numbers<[1], [0], [0], [1], [0, 0, 1, 1], [], []>} : vector<8x32xf32>, vector<32x128xf32>, vector<8x128xf32> -> vector<8x128xf32>
    %c0_3 = arith.constant 0 : index
    %c0_4 = arith.constant 0 : index
    %3 = vector.load %arg3[%c0_3, %c0_4] : memref<1x128xf32, #tpu.memory_space<vmem>>, vector<1x128xf32>
    %4 = vector.broadcast %3 : vector<1x128xf32> to vector<8x128xf32>
    %5 = arith.addf %2, %4 : vector<8x128xf32>
    %cst_5 = arith.constant 0.000000e+00 : f32
    %6 = vector.broadcast %cst_5 : f32 to vector<8x128xf32>
    %7 = arith.maximumf %5, %6 : vector<8x128xf32>
    %c0_6 = arith.constant 0 : index
    %c0_7 = arith.constant 0 : index
    %8 = vector.load %arg4[%c0_6, %c0_7] : memref<128x128xf32, #tpu.memory_space<vmem>>, vector<128x128xf32>
    %cst_8 = arith.constant dense<0.000000e+00> : vector<8x128xf32>
    %9 = tpu.matmul %7, %8, %cst_8 {dimension_numbers = #tpu.dot_dimension_numbers<[1], [0], [0], [1], [0, 0, 1, 1], [], []>} : vector<8x128xf32>, vector<128x128xf32>, vector<8x128xf32> -> vector<8x128xf32>
    %c0_9 = arith.constant 0 : index
    %c0_10 = arith.constant 0 : index
    %10 = vector.load %arg5[%c0_9, %c0_10] : memref<1x128xf32, #tpu.memory_space<vmem>>, vector<1x128xf32>
    %11 = vector.broadcast %10 : vector<1x128xf32> to vector<8x128xf32>
    %12 = arith.addf %9, %11 : vector<8x128xf32>
    %cst_11 = arith.constant 0.000000e+00 : f32
    %13 = vector.broadcast %cst_11 : f32 to vector<8x128xf32>
    %14 = arith.maximumf %12, %13 : vector<8x128xf32>
    %c0_12 = arith.constant 0 : index
    %c0_13 = arith.constant 0 : index
    %15 = vector.load %arg6[%c0_12, %c0_13] : memref<128x128xf32, #tpu.memory_space<vmem>>, vector<128x128xf32>
    %cst_14 = arith.constant dense<0.000000e+00> : vector<8x128xf32>
    %16 = tpu.matmul %14, %15, %cst_14 {dimension_numbers = #tpu.dot_dimension_numbers<[1], [0], [0], [1], [0, 0, 1, 1], [], []>} : vector<8x128xf32>, vector<128x128xf32>, vector<8x128xf32> -> vector<8x128xf32>
    %c0_15 = arith.constant 0 : index
    %c0_16 = arith.constant 0 : index
    %17 = vector.load %arg7[%c0_15, %c0_16] : memref<1x128xf32, #tpu.memory_space<vmem>>, vector<1x128xf32>
    %18 = vector.broadcast %17 : vector<1x128xf32> to vector<8x128xf32>
    %19 = arith.addf %16, %18 : vector<8x128xf32>
    %c0_17 = arith.constant 0 : index
    %c0_18 = arith.constant 0 : index
    %20 = vector.load %arg8[%c0_17, %c0_18] : memref<8x128xf32, #tpu.memory_space<vmem>>, vector<8x128xf32>
    tpu.vector_store %arg8[%c0_17, %c0_18], %19 {strides = array<i32>} : memref<8x128xf32, #tpu.memory_space<vmem>>, vector<8x128xf32>,
    return
  }
  func.func @transform_0(%arg0: i32) -> (i32, i32) {
    %c0_i32 = arith.constant 0 : i32
    %c0_i32_0 = arith.constant 0 : i32
    return %arg0, %c0_i32 : i32, i32
  }
  func.func @transform_1(%arg0: i32) -> (i32, i32) {
    %c0_i32 = arith.constant 0 : i32
    %c0_i32_0 = arith.constant 0 : i32
    %c0_i32_1 = arith.constant 0 : i32
    return %c0_i32, %c0_i32_0 : i32, i32
  }
  func.func @transform_2(%arg0: i32) -> (i32, i32) {
    %c0_i32 = arith.constant 0 : i32
    %c0_i32_0 = arith.constant 0 : i32
    %c0_i32_1 = arith.constant 0 : i32
    return %c0_i32, %c0_i32_0 : i32, i32
  }
  func.func @transform_3(%arg0: i32) -> (i32, i32) {
    %c0_i32 = arith.constant 0 : i32
    %c0_i32_0 = arith.constant 0 : i32
    %c0_i32_1 = arith.constant 0 : i32
    return %c0_i32, %c0_i32_0 : i32, i32
  }
  func.func @transform_4(%arg0: i32) -> (i32, i32) {
    %c0_i32 = arith.constant 0 : i32
    %c0_i32_0 = arith.constant 0 : i32
    %c0_i32_1 = arith.constant 0 : i32
    return %c0_i32, %c0_i32_0 : i32, i32
  }
  func.func @transform_5(%arg0: i32) -> (i32, i32) {
    %c0_i32 = arith.constant 0 : i32
    %c0_i32_0 = arith.constant 0 : i32
    %c0_i32_1 = arith.constant 0 : i32
    return %c0_i32, %c0_i32_0 : i32, i32
  }
  func.func @transform_6(%arg0: i32) -> (i32, i32) {
    %c0_i32 = arith.constant 0 : i32
    %c0_i32_0 = arith.constant 0 : i32
    %c0_i32_1 = arith.constant 0 : i32
    return %c0_i32, %c0_i32_0 : i32, i32
  }
  func.func @transform_7(%arg0: i32) -> (i32, i32) {
    %c0_i32 = arith.constant 0 : i32
    %c0_i32_0 = arith.constant 0 : i32
    return %arg0, %c0_i32 : i32, i32
  }
}

module attributes {stable_mosaic.version = 11 : i64} {
  func.func @kernel(%arg0: i32, %arg1: memref<8x32xf32, #tpu.memory_space<vmem>>, %arg2: memref<32x128xf32, #tpu.memory_space<vmem>>, %arg3: memref<1x128xf32, #tpu.memory_space<vmem>>, %arg4: memref<128x128xf32, #tpu.memory_space<vmem>>, %arg5: memref<1x128xf32, #tpu.memory_space<vmem>>, %arg6: memref<128x128xf32, #tpu.memory_space<vmem>>, %arg7: memref<1x128xf32, #tpu.memory_space<vmem>>, %arg8: memref<8x128xf32, #tpu.memory_space<vmem>>) attributes {dimension_semantics = [#tpu.dimension_semantics<parallel>], iteration_bounds = array<i64: 2>, scalar_prefetch = 0 : i64, scratch_operands = 0 : i64, tpu.core_type = #tpu.core_type<tc>, window_params = [{transform_indices = @transform_0, window_bounds = array<i64: 8, 32>}, {pipeline_mode = #tpu.pipeline_mode<synchronous>, transform_indices = @transform_1, window_bounds = array<i64: 32, 128>}, {pipeline_mode = #tpu.pipeline_mode<synchronous>, transform_indices = @transform_2, window_bounds = array<i64: 1, 128>}, {pipeline_mode = #tpu.pipeline_mode<synchronous>, transform_indices = @transform_3, window_bounds = array<i64: 128, 128>}, {pipeline_mode = #tpu.pipeline_mode<synchronous>, transform_indices = @transform_4, window_bounds = array<i64: 1, 128>}, {pipeline_mode = #tpu.pipeline_mode<synchronous>, transform_indices = @transform_5, window_bounds = array<i64: 128, 128>}, {pipeline_mode = #tpu.pipeline_mode<synchronous>, transform_indices = @transform_6, window_bounds = array<i64: 1, 128>}, {transform_indices = @transform_7, window_bounds = array<i64: 8, 128>}]} {
    %c0 = arith.constant 0 : index
    %c0_0 = arith.constant 0 : index
    %0 = vector.load %arg1[%c0, %c0_0] : memref<8x32xf32, #tpu.memory_space<vmem>>, vector<8x32xf32>
    %c0_1 = arith.constant 0 : index
    %c0_2 = arith.constant 0 : index
    %1 = vector.load %arg2[%c0_1, %c0_2] : memref<32x128xf32, #tpu.memory_space<vmem>>, vector<32x128xf32>
    %cst = arith.constant dense<0.000000e+00> : vector<8x128xf32>
    %2 = tpu.matmul %0, %1, %cst {dimension_numbers = #tpu.dot_dimension_numbers<[1], [0], [0], [1], [0, 0, 1, 1], [], []>} : vector<8x32xf32>, vector<32x128xf32>, vector<8x128xf32> -> vector<8x128xf32>
    %c0_3 = arith.constant 0 : index
    %c0_4 = arith.constant 0 : index
    %3 = vector.load %arg3[%c0_3, %c0_4] : memref<1x128xf32, #tpu.memory_space<vmem>>, vector<1x128xf32>
    %4 = vector.broadcast %3 : vector<1x128xf32> to vector<8x128xf32>
    %5 = arith.addf %2, %4 : vector<8x128xf32>
    %cst_5 = arith.constant 0.000000e+00 : f32
    %6 = vector.broadcast %cst_5 : f32 to vector<8x128xf32>
    %7 = arith.maximumf %5, %6 : vector<8x128xf32>
    %c0_6 = arith.constant 0 : index
    %c0_7 = arith.constant 0 : index
    %8 = vector.load %arg4[%c0_6, %c0_7] : memref<128x128xf32, #tpu.memory_space<vmem>>, vector<128x128xf32>
    %cst_8 = arith.constant dense<0.000000e+00> : vector<8x128xf32>
    %9 = tpu.matmul %7, %8, %cst_8 {dimension_numbers = #tpu.dot_dimension_numbers<[1], [0], [0], [1], [0, 0, 1, 1], [], []>} : vector<8x128xf32>, vector<128x128xf32>, vector<8x128xf32> -> vector<8x128xf32>
    %c0_9 = arith.constant 0 : index
    %c0_10 = arith.constant 0 : index
    %10 = vector.load %arg5[%c0_9, %c0_10] : memref<1x128xf32, #tpu.memory_space<vmem>>, vector<1x128xf32>
    %11 = vector.broadcast %10 : vector<1x128xf32> to vector<8x128xf32>
    %12 = arith.addf %9, %11 : vector<8x128xf32>
    %cst_11 = arith.constant 0.000000e+00 : f32
    %13 = vector.broadcast %cst_11 : f32 to vector<8x128xf32>
    %14 = arith.maximumf %12, %13 : vector<8x128xf32>
    %c0_12 = arith.constant 0 : index
    %c0_13 = arith.constant 0 : index
    %15 = vector.load %arg6[%c0_12, %c0_13] : memref<128x128xf32, #tpu.memory_space<vmem>>, vector<128x128xf32>
    %cst_14 = arith.constant dense<0.000000e+00> : vector<8x128xf32>
    %16 = tpu.matmul %14, %15, %cst_14 {dimension_numbers = #tpu.dot_dimension_numbers<[1], [0], [0], [1], [0, 0, 1, 1], [], []>} : vector<8x128xf32>, vector<128x128xf32>, vector<8x128xf32> -> vector<8x128xf32>
    %c0_15 = arith.constant 0 : index
    %c0_16 = arith.constant 0 : index
    %17 = vector.load %arg7[%c0_15, %c0_16] : memref<1x128xf32, #tpu.memory_space<vmem>>, vector<1x128xf32>
    %18 = vector.broadcast %17 : vector<1x128xf32> to vector<8x128xf32>
    %19 = arith.addf %16, %18 : vector<8x128xf32>
    %c0_17 = arith.constant 0 : index
    %c0_18 = arith.constant 0 : index
    %20 = vector.load %arg8[%c0_17, %c0_18] : memref<8x128xf32, #tpu.memory_space<vmem>>, vector<8x128xf32>
    tpu.vector_store %arg8[%c0_17, %c0_18], %19 {strides = array<i32>} : memref<8x128xf32, #tpu.memory_space<vmem>>, vector<8x128xf32>,
    return
  }
  func.func @transform_0(%arg0: i32) -> (i32, i32) {
    %c0_i32 = arith.constant 0 : i32
    %c0_i32_0 = arith.constant 0 : i32
    return %arg0, %c0_i32 : i32, i32
  }
  func.func @transform_1(%arg0: i32) -> (i32, i32) {
    %c0_i32 = arith.constant 0 : i32
    %c0_i32_0 = arith.constant 0 : i32
    %c0_i32_1 = arith.constant 0 : i32
    return %c0_i32, %c0_i32_0 : i32, i32
  }
  func.func @transform_2(%arg0: i32) -> (i32, i32) {
    %c0_i32 = arith.constant 0 : i32
    %c0_i32_0 = arith.constant 0 : i32
    %c0_i32_1 = arith.constant 0 : i32
    return %c0_i32, %c0_i32_0 : i32, i32
  }
  func.func @transform_3(%arg0: i32) -> (i32, i32) {
    %c0_i32 = arith.constant 0 : i32
    %c0_i32_0 = arith.constant 0 : i32
    %c0_i32_1 = arith.constant 0 : i32
    return %c0_i32, %c0_i32_0 : i32, i32
  }
  func.func @transform_4(%arg0: i32) -> (i32, i32) {
    %c0_i32 = arith.constant 0 : i32
    %c0_i32_0 = arith.constant 0 : i32
    %c0_i32_1 = arith.constant 0 : i32
    return %c0_i32, %c0_i32_0 : i32, i32
  }
  func.func @transform_5(%arg0: i32) -> (i32, i32) {
    %c0_i32 = arith.constant 0 : i32
    %c0_i32_0 = arith.constant 0 : i32
    %c0_i32_1 = arith.constant 0 : i32
    return %c0_i32, %c0_i32_0 : i32, i32
  }
  func.func @transform_6(%arg0: i32) -> (i32, i32) {
    %c0_i32 = arith.constant 0 : i32
    %c0_i32_0 = arith.constant 0 : i32
    %c0_i32_1 = arith.constant 0 : i32
    return %c0_i32, %c0_i32_0 : i32, i32
  }
  func.func @transform_7(%arg0: i32) -> (i32, i32) {
    %c0_i32 = arith.constant 0 : i32
    %c0_i32_0 = arith.constant 0 : i32
    return %arg0, %c0_i32 : i32, i32
  }
}

</mosaic_0001>

<llo_original>
// kernel: tpu_custom_call.1
$region0: #{tpu_custom_call.1}
  #allocation0 [shape = 'u32[]', space=smem, size = 0x4, offset = 0x4, fixed_abs, tag = 'smem constant byte address 0x4 - core index']
  #allocation1 [shape = 'u32[72,128]{1,0:T(1,128)}', space=vmem, size = 0x9000, scoped, tag = 'internal scratch']
  %s0 = inlined_call_operand.hbm [shape: f32[16,32], index: 0, kind: input, shape index: {}]
  %s1 = inlined_call_operand.hbm [shape: f32[32,128], index: 1, kind: input, shape index: {}]
  %s2 = inlined_call_operand.vmem [shape: f32[1,128], index: 2, kind: input, shape index: {}]
  %s3 = inlined_call_operand.hbm [shape: f32[128,128], index: 3, kind: input, shape index: {}]
  %s4 = inlined_call_operand.vmem [shape: f32[1,128], index: 4, kind: input, shape index: {}]
  %s5 = inlined_call_operand.hbm [shape: f32[128,128], index: 5, kind: input, shape index: {}]
  %s6 = inlined_call_operand.vmem [shape: f32[1,128], index: 6, kind: input, shape index: {}]
  %s7 = inlined_call_operand.hbm [shape: f32[16,128], index: 7, kind: output, shape index: {}]
  %s8 = sld [smem:[#allocation0]]
  $region77: #{tpu_custom_call.1} parent=0
    _
  %s10 = ssub.s32 1, %s8
  %s11 = scalar_select 0, %s10, %s8
  $region1: #{tpu_custom_call.1} parent=0
    #allocation2 [shape = 'u8[8192]{0}', space=vmem, size = 0x2000, scoped, tag = 'input window, operand 0']
    #allocation3 [shape = 's32[2]{0}', space=sflag, size = 0x8, scoped, tag = 'scoped memory for tpu_custom_call.1']
    #allocation4 [shape = 's32[2]{0}', space=sflag, size = 0x8, scoped, tag = 'scoped memory for tpu_custom_call.1']
    #allocation5 [shape = 'u8[16384]{0}', space=vmem, size = 0x4000, scoped, tag = 'input window, operand 1, single buffered']
    #allocation6 [shape = 's32[1]{0}', space=sflag, size = 0x4, scoped, tag = 'scoped memory for tpu_custom_call.1']
    #allocation7 [shape = 'u8[65536]{0}', space=vmem, size = 0x10000, scoped, tag = 'input window, operand 3, single buffered']
    #allocation8 [shape = 'u8[65536]{0}', space=vmem, size = 0x10000, scoped, tag = 'input window, operand 5, single buffered']
    #allocation9 [shape = 's32[1]{0}', space=sflag, size = 0x4, scoped, tag = 'scoped memory for tpu_custom_call.1']
    #allocation10 [shape = 'u8[8192]{0}', space=vmem, size = 0x2000, scoped, tag = 'output window, operand 0']
    %12 = vsyncpa [#allocation3], 0
    %s13 = scalar_lea.sflag [#allocation3], 1
    %14 = vsyncpa %s13, 0
    %15 = vsyncpa [#allocation6], 0
    %16 = vsyncpa [#allocation9], 0
    %17 = vsyncpa [#allocation4], 0
    %s18 = scalar_lea.sflag [#allocation4], 1
    %19 = vsyncpa %s18, 0
    loop: start=0, step=1, limit=4
    $region2: #{tpu_custom_call.1} parent=1 // loop_pre_header
      _
    $region3: #{tpu_custom_call.1} parent=1 // loop_header
      %s21 = sphi 0, %s25
      %p22 = scmp.ge.s32.totalorder %s21, 4
      %s31 = sphi 0, %s33
      %s34 = sphi 0, %s31
      %s35 = sphi 0, %s34
      %s51 = sphi 0, %s35
      %s55 = sphi 0, %s55
      %s57 = sphi 0, %s55
      %s58 = sphi 0, %s57
      %s72 = sphi 0, %s58
      %s76 = sphi 0, %s76
      %s78 = sphi 0, %s76
      %s79 = sphi 0, %s78
      %s93 = sphi 0, %s79
      %s97 = sphi 0, %s97
      %s99 = sphi 0, %s97
      %s100 = sphi 0, %s99
      %s114 = sphi 0, %s100
      %s118 = sphi 0, %s118
      %s120 = sphi 0, %s118
      %s121 = sphi 0, %s120
      %s135 = sphi 0, %s121
      %s139 = sphi 0, %s139
      %s141 = sphi 0, %s139
      %s142 = sphi 0, %s141
      %s156 = sphi 0, %s142
      %s160 = sphi 0, %s160
      %s162 = sphi 0, %s160
      %s163 = sphi 0, %s162
      %s177 = sphi 0, %s163
      %s183 = sphi 0, %s185
      %s186 = sphi 0, %s183
      %s187 = sphi 0, %s186
      %s203 = sphi 0, %s187
    $region4: #{tpu_custom_call.1} parent=1 // loop_header_branch
      %24 = sbr.rel (%p22) target = $region8
    $region5: #{tpu_custom_call.1} parent=1 // loop_body
      %s26 = ssub.s32 %s21, 1
      %s27 = ssub.s32 %s21, 2
      %s28 = sadd.s32 %s21, 1
      %s29 = ssub.s32 %s21, %s28
      %p30 = scmp.eq.s32.totalorder %s29, 0
      %s32 = sadd.s32 %s31, 1
      %s33 = scalar_select %p30, %s31, %s32
      %p36 = pneg %p30
      %p37 = scmp.eq.s32.totalorder %s21, 1
      %p38 = por %p36, %p37
      %p39 = scmp.ne.s32.totalorder %s31, %s34
      %p40 = scmp.eq.s32.totalorder %s21, 0
      %p41 = por %p39, %p40
      %p42 = scmp.ne.s32.totalorder %s31, %s34
      %p43 = scmp.eq.s32.totalorder %s26, 1
      %p44 = por %p42, %p43
      %p45 = scmp.ne.s32.totalorder %s34, %s35
      %p46 = scmp.eq.s32.totalorder %s26, 0
      %p47 = por %p45, %p46
      %p48 = scmp.ne.s32.totalorder %s34, %s35
      %p49 = scmp.eq.s32.totalorder %s27, 1
      %p50 = por %p48, %p49
      %p52 = scmp.ne.s32.totalorder %s35, %s51
      %p53 = scmp.eq.s32.totalorder %s27, 0
      %p54 = por %p52, %p53
      %s56 = sadd.s32 %s55, 1
      %p59 = scmp.eq.s32.totalorder %s21, 1
      %p60 = scmp.ne.s32.totalorder %s55, %s57
      %p61 = scmp.eq.s32.totalorder %s21, 0
      %p62 = por %p60, %p61
      %p63 = scmp.ne.s32.totalorder %s55, %s57
      %p64 = scmp.eq.s32.totalorder %s26, 1
      %p65 = por %p63, %p64
      %p66 = scmp.ne.s32.totalorder %s57, %s58
      %p67 = scmp.eq.s32.totalorder %s26, 0
      %p68 = por %p66, %p67
      %p69 = scmp.ne.s32.totalorder %s57, %s58
      %p70 = scmp.eq.s32.totalorder %s27, 1
      %p71 = por %p69, %p70
      %p73 = scmp.ne.s32.totalorder %s58, %s72
      %p74 = scmp.eq.s32.totalorder %s27, 0
      %p75 = por %p73, %p74
      %s77 = sadd.s32 %s76, 1
      %p80 = scmp.eq.s32.totalorder %s21, 1
      %p81 = scmp.ne.s32.totalorder %s76, %s78
      %p82 = scmp.eq.s32.totalorder %s21, 0
      %p83 = por %p81, %p82
      %p84 = scmp.ne.s32.totalorder %s76, %s78
      %p85 = scmp.eq.s32.totalorder %s26, 1
      %p86 = por %p84, %p85
      %p87 = scmp.ne.s32.totalorder %s78, %s79
      %p88 = scmp.eq.s32.totalorder %s26, 0
      %p89 = por %p87, %p88
      %p90 = scmp.ne.s32.totalorder %s78, %s79
      %p91 = scmp.eq.s32.totalorder %s27, 1
      %p92 = por %p90, %p91
      %p94 = scmp.ne.s32.totalorder %s79, %s93
      %p95 = scmp.eq.s32.totalorder %s27, 0
      %p96 = por %p94, %p95
      %s98 = sadd.s32 %s97, 1
      %p101 = scmp.eq.s32.totalorder %s21, 1
      %p102 = scmp.ne.s32.totalorder %s97, %s99
      %p103 = scmp.eq.s32.totalorder %s21, 0
      %p104 = por %p102, %p103
      %p105 = scmp.ne.s32.totalorder %s97, %s99
      %p106 = scmp.eq.s32.totalorder %s26, 1
      %p107 = por %p105, %p106
      %p108 = scmp.ne.s32.totalorder %s99, %s100
      %p109 = scmp.eq.s32.totalorder %s26, 0
      %p110 = por %p108, %p109
      %p111 = scmp.ne.s32.totalorder %s99, %s100
      %p112 = scmp.eq.s32.totalorder %s27, 1
      %p113 = por %p111, %p112
      %p115 = scmp.ne.s32.totalorder %s100, %s114
      %p116 = scmp.eq.s32.totalorder %s27, 0
      %p117 = por %p115, %p116
      %s119 = sadd.s32 %s118, 1
      %p122 = scmp.eq.s32.totalorder %s21, 1
      %p123 = scmp.ne.s32.totalorder %s118, %s120
      %p124 = scmp.eq.s32.totalorder %s21, 0
      %p125 = por %p123, %p124
      %p126 = scmp.ne.s32.totalorder %s118, %s120
      %p127 = scmp.eq.s32.totalorder %s26, 1
      %p128 = por %p126, %p127
      %p129 = scmp.ne.s32.totalorder %s120, %s121
      %p130 = scmp.eq.s32.totalorder %s26, 0
      %p131 = por %p129, %p130
      %p132 = scmp.ne.s32.totalorder %s120, %s121
      %p133 = scmp.eq.s32.totalorder %s27, 1
      %p134 = por %p132, %p133
      %p136 = scmp.ne.s32.totalorder %s121, %s135
      %p137 = scmp.eq.s32.totalorder %s27, 0
      %p138 = por %p136, %p137
      %s140 = sadd.s32 %s139, 1
      %p143 = scmp.eq.s32.totalorder %s21, 1
      %p144 = scmp.ne.s32.totalorder %s139, %s141
      %p145 = scmp.eq.s32.totalorder %s21, 0
      %p146 = por %p144, %p145
      %p147 = scmp.ne.s32.totalorder %s139, %s141
      %p148 = scmp.eq.s32.totalorder %s26, 1
      %p149 = por %p147, %p148
      %p150 = scmp.ne.s32.totalorder %s141, %s142
      %p151 = scmp.eq.s32.totalorder %s26, 0
      %p152 = por %p150, %p151
      %p153 = scmp.ne.s32.totalorder %s141, %s142
      %p154 = scmp.eq.s32.totalorder %s27, 1
      %p155 = por %p153, %p154
      %p157 = scmp.ne.s32.totalorder %s142, %s156
      %p158 = scmp.eq.s32.totalorder %s27, 0
      %p159 = por %p157, %p158
      %s161 = sadd.s32 %s160, 1
      %p164 = scmp.eq.s32.totalorder %s21, 1
      %p165 = scmp.ne.s32.totalorder %s160, %s162
      %p166 = scmp.eq.s32.totalorder %s21, 0
      %p167 = por %p165, %p166
      %p168 = scmp.ne.s32.totalorder %s160, %s162
      %p169 = scmp.eq.s32.totalorder %s26, 1
      %p170 = por %p168, %p169
      %p171 = scmp.ne.s32.totalorder %s162, %s163
      %p172 = scmp.eq.s32.totalorder %s26, 0
      %p173 = por %p171, %p172
      %p174 = scmp.ne.s32.totalorder %s162, %s163
      %p175 = scmp.eq.s32.totalorder %s27, 1
      %p176 = por %p174, %p175
      %p178 = scmp.ne.s32.totalorder %s163, %s177
      %p179 = scmp.eq.s32.totalorder %s27, 0
      %p180 = por %p178, %p179
      %s181 = ssub.s32 %s21, %s28
      %p182 = scmp.eq.s32.totalorder %s181, 0
      %s184 = sadd.s32 %s183, 1
      %s185 = scalar_select %p182, %s183, %s184
      %p188 = pneg %p182
      %p189 = scmp.eq.s32.totalorder %s21, 1
      %p190 = por %p188, %p189
      %p191 = scmp.ne.s32.totalorder %s183, %s186
      %p192 = scmp.eq.s32.totalorder %s21, 0
      %p193 = por %p191, %p192
      %p194 = scmp.ne.s32.totalorder %s183, %s186
      %p195 = scmp.eq.s32.totalorder %s26, 1
      %p196 = por %p194, %p195
      %p197 = scmp.ne.s32.totalorder %s186, %s187
      %p198 = scmp.eq.s32.totalorder %s26, 0
      %p199 = por %p197, %p198
      %p200 = scmp.ne.s32.totalorder %s186, %s187
      %p201 = scmp.eq.s32.totalorder %s27, 1
      %p202 = por %p200, %p201
      %p204 = scmp.ne.s32.totalorder %s187, %s203
      %p205 = scmp.eq.s32.totalorder %s27, 0
      %p206 = por %p204, %p205
      %p207 = scmp.le.s32.totalorder 1, %s21
      %p208 = scmp.lt.s32.totalorder %s21, 3
      %p209 = pnand %p207, %p208
      %p210 = pneg %p209
      // Predicated region
      $region9: #{tpu_custom_call.1} parent=5 // pred_check
        _
      $region10: #{tpu_custom_call.1} parent=5 // pred_check_branch
        %212 = sbr.rel (%p209) target = $region12
      $region11: #{tpu_custom_call.1} parent=5 // pred_region
        %s213 = ssub.s32 %s21, 1
        // Predicated region
        $region13: #{tpu_custom_call.1} parent=11 // pred_check
          %p214 = pneg %p68
        $region14: #{tpu_custom_call.1} parent=11 // pred_check_branch
          %216 = sbr.rel (%p214) target = $region16
        $region15: #{tpu_custom_call.1} parent=11 // pred_region
          %218 = vsyncadd [#allocation6], 0
          %s219 = sshll.u32 %s1, 4
          %s220 = int_to_ptr.hbm [resolvable:$true] %s219
          %s221 = sshll.u32 [#allocation5], 4
          %s222 = int_to_ptr.vmem [resolvable:$true] %s221
          %227 = dma.hbm_to_vmem [thread:$0]  %s220, 512, %s222, [#allocation6], 128, 128, 8
        $region16: #{tpu_custom_call.1} parent=11 // pred_fallthru
          _
        // Predicated region
        $region17: #{tpu_custom_call.1} parent=11 // pred_check
          %p228 = pneg %p89
        $region18: #{tpu_custom_call.1} parent=11 // pred_check_branch
          %230 = sbr.rel (%p228) target = $region20
        $region19: #{tpu_custom_call.1} parent=11 // pred_region
          _
        $region20: #{tpu_custom_call.1} parent=11 // pred_fallthru
          _
        // Predicated region
        $region21: #{tpu_custom_call.1} parent=11 // pred_check
          %p231 = pneg %p110
        $region22: #{tpu_custom_call.1} parent=11 // pred_check_branch
          %233 = sbr.rel (%p231) target = $region24
        $region23: #{tpu_custom_call.1} parent=11 // pred_region
          %235 = vsyncadd [#allocation6], 0
          %s236 = sshll.u32 %s3, 4
          %s237 = int_to_ptr.hbm [resolvable:$true] %s236
          %s238 = sshll.u32 [#allocation7], 4
          %s239 = int_to_ptr.vmem [resolvable:$true] %s238
          %244 = dma.hbm_to_vmem [thread:$0]  %s237, 2048, %s239, [#allocation6], 128, 128, 8
        $region24: #{tpu_custom_call.1} parent=11 // pred_fallthru
          _
        // Predicated region
        $region25: #{tpu_custom_call.1} parent=11 // pred_check
          %p245 = pneg %p131
        $region26: #{tpu_custom_call.1} parent=11 // pred_check_branch
          %247 = sbr.rel (%p245) target = $region28
        $region27: #{tpu_custom_call.1} parent=11 // pred_region
          _
        $region28: #{tpu_custom_call.1} parent=11 // pred_fallthru
          _
        // Predicated region
        $region29: #{tpu_custom_call.1} parent=11 // pred_check
          %p248 = pneg %p152
        $region30: #{tpu_custom_call.1} parent=11 // pred_check_branch
          %250 = sbr.rel (%p248) target = $region32
        $region31: #{tpu_custom_call.1} parent=11 // pred_region
          %252 = vsyncadd [#allocation9], 0
          %s253 = sshll.u32 %s5, 4
          %s254 = int_to_ptr.hbm [resolvable:$true] %s253
          %s255 = sshll.u32 [#allocation8], 4
          %s256 = int_to_ptr.vmem [resolvable:$true] %s255
          %261 = dma.hbm_to_vmem [thread:$0]  %s254, 2048, %s256, [#allocation9], 128, 128, 8
        $region32: #{tpu_custom_call.1} parent=11 // pred_fallthru
          _
        // Predicated region
        $region33: #{tpu_custom_call.1} parent=11 // pred_check
          %p262 = pneg %p173
        $region34: #{tpu_custom_call.1} parent=11 // pred_check_branch
          %264 = sbr.rel (%p262) target = $region36
        $region35: #{tpu_custom_call.1} parent=11 // pred_region
          _
        $region36: #{tpu_custom_call.1} parent=11 // pred_fallthru
          _
      $region12: #{tpu_custom_call.1} parent=5 // pred_fallthru
        _
      %p265 = scmp.lt.s32.totalorder %s21, 2
      // Predicated region
      $region37: #{tpu_custom_call.1} parent=5 // pred_check
        %p266 = pneg %p265
      $region38: #{tpu_custom_call.1} parent=5 // pred_check_branch
        %268 = sbr.rel (%p266) target = $region40
      $region39: #{tpu_custom_call.1} parent=5 // pred_region
        // Predicated region
        $region41: #{tpu_custom_call.1} parent=39 // pred_check
          %p269 = pneg %p41
        $region42: #{tpu_custom_call.1} parent=39 // pred_check_branch
          %271 = sbr.rel (%p269) target = $region44
        $region43: #{tpu_custom_call.1} parent=39 // pred_region
          %s272 = sand.u32 %s31, 1
          %s273 = scalar_lea.sflag [#allocation3], %s272
          %s274 = sand.u32 %s31, 1
          %s275 = smul.addr %s274, 8
          %s276 = scalar_lea.vmem [#allocation2], %s275
          %278 = vsyncadd %s273, 0
          %s279 = smul.addr %s21, 8
          %s280 = scalar_lea.hbm %s0, %s279
          %s282 = sshll.u32 %s280, 4
          %s283 = int_to_ptr.hbm [resolvable:$true] %s282
          %s284 = sshll.u32 %s276, 4
          %s285 = int_to_ptr.vmem [resolvable:$true] %s284
          %287 = dma.hbm_to_vmem [thread:$0]  %s283, 128, %s285, %s273
        $region44: #{tpu_custom_call.1} parent=39 // pred_fallthru
          _
      $region40: #{tpu_custom_call.1} parent=5 // pred_fallthru
        _
      %p288 = scmp.le.s32.totalorder 1, %s21
      %p289 = scmp.lt.s32.totalorder %s21, 3
      %p290 = pnand %p288, %p289
      %p291 = pneg %p290
      // Predicated region
      $region45: #{tpu_custom_call.1} parent=5 // pred_check
        _
      $region46: #{tpu_custom_call.1} parent=5 // pred_check_branch
        %293 = sbr.rel (%p290) target = $region48
      $region47: #{tpu_custom_call.1} parent=5 // pred_region
        %s294 = ssub.s32 %s21, 1
        %s295 = sand.u32 %s34, 1
        %s296 = scalar_lea.sflag [#allocation3], %s295
        %s297 = sand.u32 %s34, 1
        %s298 = smul.addr %s297, 8
        %s299 = scalar_lea.vmem [#allocation2], %s298
        // Predicated region
        $region49: #{tpu_custom_call.1} parent=47 // pred_check
          %p300 = pneg %p47
        $region50: #{tpu_custom_call.1} parent=47 // pred_check_branch
          %302 = sbr.rel (%p300) target = $region52
        $region51: #{tpu_custom_call.1} parent=47 // pred_region
          %304 = dma.done %s296, 128
        $region52: #{tpu_custom_call.1} parent=47 // pred_fallthru
          _
        // Predicated region
        $region53: #{tpu_custom_call.1} parent=47 // pred_check
          %p305 = pneg %p68
        $region54: #{tpu_custom_call.1} parent=47 // pred_check_branch
          %307 = sbr.rel (%p305) target = $region56
        $region55: #{tpu_custom_call.1} parent=47 // pred_region
          %309 = dma.done [#allocation6], 512
        $region56: #{tpu_custom_call.1} parent=47 // pred_fallthru
          _
        // Predicated region
        $region57: #{tpu_custom_call.1} parent=47 // pred_check
          %p310 = pneg %p110
        $region58: #{tpu_custom_call.1} parent=47 // pred_check_branch
          %312 = sbr.rel (%p310) target = $region60
        $region59: #{tpu_custom_call.1} parent=47 // pred_region
          %314 = dma.done [#allocation6], 2048
        $region60: #{tpu_custom_call.1} parent=47 // pred_fallthru
          _
        // Predicated region
        $region61: #{tpu_custom_call.1} parent=47 // pred_check
          %p315 = pneg %p152
        $region62: #{tpu_custom_call.1} parent=47 // pred_check_branch
          %317 = sbr.rel (%p315) target = $region64
        $region63: #{tpu_custom_call.1} parent=47 // pred_region
          %319 = dma.done [#allocation9], 2048
        $region64: #{tpu_custom_call.1} parent=47 // pred_fallthru
          _
        %s320 = sand.u32 %s34, 1
        %s321 = scalar_lea.sflag [#allocation3], %s320
        %s322 = sand.u32 %s34, 1
        %s323 = smul.addr %s322, 8
        %s324 = scalar_lea.vmem [#allocation2], %s323
        %p325 = pneg %p47
        %p326 = pneg %p44
        %p327 = pneg %p68
        %p328 = pneg %p65
        %p329 = pneg %p89
        %p330 = pneg %p86
        %p331 = pneg %p110
        %p332 = pneg %p107
        %p333 = pneg %p131
        %p334 = pneg %p128
        %p335 = pneg %p152
        %p336 = pneg %p149
        %p337 = pneg %p173
        %p338 = pneg %p170
        %p339 = pneg %p199
        %p340 = pneg %p196
        %s341 = sand.u32 %s186, 1
        %s342 = scalar_lea.sflag [#allocation4], %s341
        %s343 = sand.u32 %s186, 1
        %s344 = smul.addr %s343, 8
        %s345 = scalar_lea.vmem [#allocation10], %s344
        %v346 = vld [vmem:[%s299] sm:$0xff]
        %v347 = vld [vmem:[#allocation5] sm:$0xff]
        %v348 = vld [vmem:[#allocation5 + $0x8] sm:$0xff]
        %v349 = vld [vmem:[#allocation5 + $0x10] sm:$0xff]
        %v350 = vld [vmem:[#allocation5 + $0x18] sm:$0xff]
        %v351 = vld [vmem:[%s2] sm:$0x1]
        %v353 = vperm.slane %v351, 0
        %vm355 = vcmask 261120
        %v357 = vsel %vm355, %v346, 0
        %359 = vmatpush.msra.mxu0 0.0
        %360 = vmatpush.msra.mxu0 0.0
        %361 = vmatpush.msra.mxu0 0.0
        %362 = vmatpush.msra.mxu0 0.0
        %363 = vmatpush.msra.mxu0 0.0
        %364 = vmatpush.msra.mxu0 0.0
        %365 = vmatpush.msra.mxu0 0.0
        %366 = vmatpush.msra.mxu0 0.0
        %367 = vmatpush.msra.mxu0 0.0
        %368 = vmatpush.msra.mxu0 0.0
        %369 = vmatpush.msra.mxu0 0.0
        %370 = vmatpush.msra.mxu0 0.0
        %371 = vmatpush.msra.mxu0 %v350
        %372 = vmatpush.msra.mxu0 %v349
        %373 = vmatpush.msra.mxu0 %v348
        %374 = vmatpush.msra.mxu0 %v347
        %375 = vmatmul.f32.gmra.mxu0 %v357
        %v376 = vpop.f32.mrf.mxu0
        %v377 = vadd.f32 %v353, %v376
        %378 = vdwg.mxu0
        %v379 = vmax.f32 %v377, 0.0
        %v380 = vld [vmem:[#allocation7] sm:$0xff]
        %v381 = vld [vmem:[#allocation7 + $0x8] sm:$0xff]
        %v382 = vld [vmem:[#allocation7 + $0x10] sm:$0xff]
        %v383 = vld [vmem:[#allocation7 + $0x18] sm:$0xff]
        %v384 = vld [vmem:[#allocation7 + $0x20] sm:$0xff]
        %v385 = vld [vmem:[#allocation7 + $0x28] sm:$0xff]
        %v386 = vld [vmem:[#allocation7 + $0x30] sm:$0xff]
        %v387 = vld [vmem:[#allocation7 + $0x38] sm:$0xff]
        %v388 = vld [vmem:[#allocation7 + $0x40] sm:$0xff]
        %v389 = vld [vmem:[#allocation7 + $0x48] sm:$0xff]
        %v390 = vld [vmem:[#allocation7 + $0x50] sm:$0xff]
        %v391 = vld [vmem:[#allocation7 + $0x58] sm:$0xff]
        %v392 = vld [vmem:[#allocation7 + $0x60] sm:$0xff]
        %v393 = vld [vmem:[#allocation7 + $0x68] sm:$0xff]
        %v394 = vld [vmem:[#allocation7 + $0x70] sm:$0xff]
        %v395 = vld [vmem:[#allocation7 + $0x78] sm:$0xff]
        %v396 = vld [vmem:[%s4] sm:$0x1]
        %v398 = vperm.slane %v396, 0
        %400 = vmatpush.msra.mxu0 %v395
        %401 = vmatpush.msra.mxu0 %v394
        %402 = vmatpush.msra.mxu0 %v393
        %403 = vmatpush.msra.mxu0 %v392
        %404 = vmatpush.msra.mxu0 %v391
        %405 = vmatpush.msra.mxu0 %v390
        %406 = vmatpush.msra.mxu0 %v389
        %407 = vmatpush.msra.mxu0 %v388
        %408 = vmatpush.msra.mxu0 %v387
        %409 = vmatpush.msra.mxu0 %v386
        %410 = vmatpush.msra.mxu0 %v385
        %411 = vmatpush.msra.mxu0 %v384
        %412 = vmatpush.msra.mxu0 %v383
        %413 = vmatpush.msra.mxu0 %v382
        %414 = vmatpush.msra.mxu0 %v381
        %415 = vmatpush.msra.mxu0 %v380
        %416 = vmatmul.f32.gmra.mxu0 %v379
        %v417 = vpop.f32.mrf.mxu0
        %v418 = vadd.f32 %v398, %v417
        %419 = vdwg.mxu0
        %v420 = vmax.f32 %v418, 0.0
        %v421 = vld [vmem:[#allocation8] sm:$0xff]
        %v422 = vld [vmem:[#allocation8 + $0x8] sm:$0xff]
        %v423 = vld [vmem:[#allocation8 + $0x10] sm:$0xff]
        %v424 = vld [vmem:[#allocation8 + $0x18] sm:$0xff]
        %v425 = vld [vmem:[#allocation8 + $0x20] sm:$0xff]
        %v426 = vld [vmem:[#allocation8 + $0x28] sm:$0xff]
        %v427 = vld [vmem:[#allocation8 + $0x30] sm:$0xff]
        %v428 = vld [vmem:[#allocation8 + $0x38] sm:$0xff]
        %v429 = vld [vmem:[#allocation8 + $0x40] sm:$0xff]
        %v430 = vld [vmem:[#allocation8 + $0x48] sm:$0xff]
        %v431 = vld [vmem:[#allocation8 + $0x50] sm:$0xff]
        %v432 = vld [vmem:[#allocation8 + $0x58] sm:$0xff]
        %v433 = vld [vmem:[#allocation8 + $0x60] sm:$0xff]
        %v434 = vld [vmem:[#allocation8 + $0x68] sm:$0xff]
        %v435 = vld [vmem:[#allocation8 + $0x70] sm:$0xff]
        %v436 = vld [vmem:[#allocation8 + $0x78] sm:$0xff]
        %v437 = vld [vmem:[%s6] sm:$0x1]
        %v439 = vperm.slane %v437, 0
        %441 = vmatpush.msra.mxu0 %v436
        %442 = vmatpush.msra.mxu0 %v435
        %443 = vmatpush.msra.mxu0 %v434
        %444 = vmatpush.msra.mxu0 %v433
        %445 = vmatpush.msra.mxu0 %v432
        %446 = vmatpush.msra.mxu0 %v431
        %447 = vmatpush.msra.mxu0 %v430
        %448 = vmatpush.msra.mxu0 %v429
        %449 = vmatpush.msra.mxu0 %v428
        %450 = vmatpush.msra.mxu0 %v427
        %451 = vmatpush.msra.mxu0 %v426
        %452 = vmatpush.msra.mxu0 %v425
        %453 = vmatpush.msra.mxu0 %v424
        %454 = vmatpush.msra.mxu0 %v423
        %455 = vmatpush.msra.mxu0 %v422
        %456 = vmatpush.msra.mxu0 %v421
        %457 = vmatmul.f32.gmra.mxu0 %v420
        %v458 = vpop.f32.mrf.mxu0
        %v459 = vadd.f32 %v439, %v458
        %460 = vdwg.mxu0
        %461 = vst [vmem:[%s345] sm:$0xff] %v459
        %s462 = sand.u32 %s186, 1
        %s463 = scalar_lea.sflag [#allocation4], %s462
        %s464 = sand.u32 %s186, 1
        %s465 = smul.addr %s464, 8
        %s466 = scalar_lea.vmem [#allocation10], %s465
        // Predicated region
        $region65: #{tpu_custom_call.1} parent=47 // pred_check
          %p467 = pneg %p196
        $region66: #{tpu_custom_call.1} parent=47 // pred_check_branch
          %469 = sbr.rel (%p467) target = $region68
        $region67: #{tpu_custom_call.1} parent=47 // pred_region
          %471 = vsyncadd %s463, 0
          %s472 = smul.addr %s26, 8
          %s473 = scalar_lea.hbm %s7, %s472
          %s475 = sshll.u32 %s466, 4
          %s476 = int_to_ptr.vmem [resolvable:$true] %s475
          %s477 = sshll.u32 %s473, 4
          %s478 = int_to_ptr.hbm [resolvable:$true] %s477
          %480 = dma.vmem_to_hbm [thread:$0]  %s476, 128, %s478, %s463
        $region68: #{tpu_custom_call.1} parent=47 // pred_fallthru
          _
      $region48: #{tpu_custom_call.1} parent=5 // pred_fallthru
        _
      %p481 = scmp.le.s32.totalorder 2, %s21
      // Predicated region
      $region69: #{tpu_custom_call.1} parent=5 // pred_check
        %p482 = pneg %p481
      $region70: #{tpu_custom_call.1} parent=5 // pred_check_branch
        %484 = sbr.rel (%p482) target = $region72
      $region71: #{tpu_custom_call.1} parent=5 // pred_region
        %s485 = ssub.s32 %s21, 2
        // Predicated region
        $region73: #{tpu_custom_call.1} parent=71 // pred_check
          %p486 = pneg %p202
        $region74: #{tpu_custom_call.1} parent=71 // pred_check_branch
          %488 = sbr.rel (%p486) target = $region76
        $region75: #{tpu_custom_call.1} parent=71 // pred_region
          %s489 = sand.u32 %s187, 1
          %s490 = scalar_lea.sflag [#allocation4], %s489
          %s491 = sand.u32 %s187, 1
          %s492 = smul.addr %s491, 8
          %s493 = scalar_lea.vmem [#allocation10], %s492
          %495 = dma.done %s490, 128
        $region76: #{tpu_custom_call.1} parent=71 // pred_fallthru
          _
      $region72: #{tpu_custom_call.1} parent=5 // pred_fallthru
        _
    $region6: #{tpu_custom_call.1} parent=1 // loop_footer
      %s25 = sadd.s32 1, %s21
    $region7: #{tpu_custom_call.1} parent=1 // loop_footer_branch
      %20 = sbr.rel target = $region3
    $region8: #{tpu_custom_call.1} parent=1 // loop_exit
      _
    %496 = vsyncpa [#allocation3], 1
    %s497 = scalar_lea.sflag [#allocation3], 1
    %498 = vsyncpa %s497, 1
    %499 = vsyncpa [#allocation6], 1
    %500 = vsyncpa [#allocation9], 1
    %501 = vsyncpa [#allocation4], 1
    %s502 = scalar_lea.sflag [#allocation4], 1
    %503 = vsyncpa %s502, 1

// kernel: tpu_custom_call.1
$region0: #{tpu_custom_call.1}
  #allocation0 [shape = 'u32[]', space=smem, size = 0x4, offset = 0x4, fixed_abs, tag = 'smem constant byte address 0x4 - core index']
  #allocation1 [shape = 'u32[72,128]{1,0:T(1,128)}', space=vmem, size = 0x9000, scoped, tag = 'internal scratch']
  %s0 = inlined_call_operand.hbm [shape: f32[16,32], index: 0, kind: input, shape index: {}]
  %s1 = inlined_call_operand.hbm [shape: f32[32,128], index: 1, kind: input, shape index: {}]
  %s2 = inlined_call_operand.vmem [shape: f32[1,128], index: 2, kind: input, shape index: {}]
  %s3 = inlined_call_operand.hbm [shape: f32[128,128], index: 3, kind: input, shape index: {}]
  %s4 = inlined_call_operand.vmem [shape: f32[1,128], index: 4, kind: input, shape index: {}]
  %s5 = inlined_call_operand.hbm [shape: f32[128,128], index: 5, kind: input, shape index: {}]
  %s6 = inlined_call_operand.vmem [shape: f32[1,128], index: 6, kind: input, shape index: {}]
  %s7 = inlined_call_operand.hbm [shape: f32[16,128], index: 7, kind: output, shape index: {}]
  %s8 = sld [smem:[#allocation0]]
  $region77: #{tpu_custom_call.1} parent=0
    _
  %s10 = ssub.s32 1, %s8
  %s11 = scalar_select 0, %s10, %s8
  $region1: #{tpu_custom_call.1} parent=0
    #allocation2 [shape = 'u8[8192]{0}', space=vmem, size = 0x2000, scoped, tag = 'input window, operand 0']
    #allocation3 [shape = 's32[2]{0}', space=sflag, size = 0x8, scoped, tag = 'scoped memory for tpu_custom_call.1']
    #allocation4 [shape = 's32[2]{0}', space=sflag, size = 0x8, scoped, tag = 'scoped memory for tpu_custom_call.1']
    #allocation5 [shape = 'u8[16384]{0}', space=vmem, size = 0x4000, scoped, tag = 'input window, operand 1, single buffered']
    #allocation6 [shape = 's32[1]{0}', space=sflag, size = 0x4, scoped, tag = 'scoped memory for tpu_custom_call.1']
    #allocation7 [shape = 'u8[65536]{0}', space=vmem, size = 0x10000, scoped, tag = 'input window, operand 3, single buffered']
    #allocation8 [shape = 'u8[65536]{0}', space=vmem, size = 0x10000, scoped, tag = 'input window, operand 5, single buffered']
    #allocation9 [shape = 's32[1]{0}', space=sflag, size = 0x4, scoped, tag = 'scoped memory for tpu_custom_call.1']
    #allocation10 [shape = 'u8[8192]{0}', space=vmem, size = 0x2000, scoped, tag = 'output window, operand 0']
    %12 = vsyncpa [#allocation3], 0
    %s13 = scalar_lea.sflag [#allocation3], 1
    %14 = vsyncpa %s13, 0
    %15 = vsyncpa [#allocation6], 0
    %16 = vsyncpa [#allocation9], 0
    %17 = vsyncpa [#allocation4], 0
    %s18 = scalar_lea.sflag [#allocation4], 1
    %19 = vsyncpa %s18, 0
    loop: start=0, step=1, limit=4
    $region2: #{tpu_custom_call.1} parent=1 // loop_pre_header
      _
    $region3: #{tpu_custom_call.1} parent=1 // loop_header
      %s21 = sphi 0, %s25
      %p22 = scmp.ge.s32.totalorder %s21, 4
      %s31 = sphi 0, %s33
      %s34 = sphi 0, %s31
      %s35 = sphi 0, %s34
      %s51 = sphi 0, %s35
      %s55 = sphi 0, %s55
      %s57 = sphi 0, %s55
      %s58 = sphi 0, %s57
      %s72 = sphi 0, %s58
      %s76 = sphi 0, %s76
      %s78 = sphi 0, %s76
      %s79 = sphi 0, %s78
      %s93 = sphi 0, %s79
      %s97 = sphi 0, %s97
      %s99 = sphi 0, %s97
      %s100 = sphi 0, %s99
      %s114 = sphi 0, %s100
      %s118 = sphi 0, %s118
      %s120 = sphi 0, %s118
      %s121 = sphi 0, %s120
      %s135 = sphi 0, %s121
      %s139 = sphi 0, %s139
      %s141 = sphi 0, %s139
      %s142 = sphi 0, %s141
      %s156 = sphi 0, %s142
      %s160 = sphi 0, %s160
      %s162 = sphi 0, %s160
      %s163 = sphi 0, %s162
      %s177 = sphi 0, %s163
      %s183 = sphi 0, %s185
      %s186 = sphi 0, %s183
      %s187 = sphi 0, %s186
      %s203 = sphi 0, %s187
    $region4: #{tpu_custom_call.1} parent=1 // loop_header_branch
      %24 = sbr.rel (%p22) target = $region8
    $region5: #{tpu_custom_call.1} parent=1 // loop_body
      %s26 = ssub.s32 %s21, 1
      %s27 = ssub.s32 %s21, 2
      %s28 = sadd.s32 %s21, 1
      %s29 = ssub.s32 %s21, %s28
      %p30 = scmp.eq.s32.totalorder %s29, 0
      %s32 = sadd.s32 %s31, 1
      %s33 = scalar_select %p30, %s31, %s32
      %p36 = pneg %p30
      %p37 = scmp.eq.s32.totalorder %s21, 1
      %p38 = por %p36, %p37
      %p39 = scmp.ne.s32.totalorder %s31, %s34
      %p40 = scmp.eq.s32.totalorder %s21, 0
      %p41 = por %p39, %p40
      %p42 = scmp.ne.s32.totalorder %s31, %s34
      %p43 = scmp.eq.s32.totalorder %s26, 1
      %p44 = por %p42, %p43
      %p45 = scmp.ne.s32.totalorder %s34, %s35
      %p46 = scmp.eq.s32.totalorder %s26, 0
      %p47 = por %p45, %p46
      %p48 = scmp.ne.s32.totalorder %s34, %s35
      %p49 = scmp.eq.s32.totalorder %s27, 1
      %p50 = por %p48, %p49
      %p52 = scmp.ne.s32.totalorder %s35, %s51
      %p53 = scmp.eq.s32.totalorder %s27, 0
      %p54 = por %p52, %p53
      %s56 = sadd.s32 %s55, 1
      %p59 = scmp.eq.s32.totalorder %s21, 1
      %p60 = scmp.ne.s32.totalorder %s55, %s57
      %p61 = scmp.eq.s32.totalorder %s21, 0
      %p62 = por %p60, %p61
      %p63 = scmp.ne.s32.totalorder %s55, %s57
      %p64 = scmp.eq.s32.totalorder %s26, 1
      %p65 = por %p63, %p64
      %p66 = scmp.ne.s32.totalorder %s57, %s58
      %p67 = scmp.eq.s32.totalorder %s26, 0
      %p68 = por %p66, %p67
      %p69 = scmp.ne.s32.totalorder %s57, %s58
      %p70 = scmp.eq.s32.totalorder %s27, 1
      %p71 = por %p69, %p70
      %p73 = scmp.ne.s32.totalorder %s58, %s72
      %p74 = scmp.eq.s32.totalorder %s27, 0
      %p75 = por %p73, %p74
      %s77 = sadd.s32 %s76, 1
      %p80 = scmp.eq.s32.totalorder %s21, 1
      %p81 = scmp.ne.s32.totalorder %s76, %s78
      %p82 = scmp.eq.s32.totalorder %s21, 0
      %p83 = por %p81, %p82
      %p84 = scmp.ne.s32.totalorder %s76, %s78
      %p85 = scmp.eq.s32.totalorder %s26, 1
      %p86 = por %p84, %p85
      %p87 = scmp.ne.s32.totalorder %s78, %s79
      %p88 = scmp.eq.s32.totalorder %s26, 0
      %p89 = por %p87, %p88
      %p90 = scmp.ne.s32.totalorder %s78, %s79
      %p91 = scmp.eq.s32.totalorder %s27, 1
      %p92 = por %p90, %p91
      %p94 = scmp.ne.s32.totalorder %s79, %s93
      %p95 = scmp.eq.s32.totalorder %s27, 0
      %p96 = por %p94, %p95
      %s98 = sadd.s32 %s97, 1
      %p101 = scmp.eq.s32.totalorder %s21, 1
      %p102 = scmp.ne.s32.totalorder %s97, %s99
      %p103 = scmp.eq.s32.totalorder %s21, 0
      %p104 = por %p102, %p103
      %p105 = scmp.ne.s32.totalorder %s97, %s99
      %p106 = scmp.eq.s32.totalorder %s26, 1
      %p107 = por %p105, %p106
      %p108 = scmp.ne.s32.totalorder %s99, %s100
      %p109 = scmp.eq.s32.totalorder %s26, 0
      %p110 = por %p108, %p109
      %p111 = scmp.ne.s32.totalorder %s99, %s100
      %p112 = scmp.eq.s32.totalorder %s27, 1
      %p113 = por %p111, %p112
      %p115 = scmp.ne.s32.totalorder %s100, %s114
      %p116 = scmp.eq.s32.totalorder %s27, 0
      %p117 = por %p115, %p116
      %s119 = sadd.s32 %s118, 1
      %p122 = scmp.eq.s32.totalorder %s21, 1
      %p123 = scmp.ne.s32.totalorder %s118, %s120
      %p124 = scmp.eq.s32.totalorder %s21, 0
      %p125 = por %p123, %p124
      %p126 = scmp.ne.s32.totalorder %s118, %s120
      %p127 = scmp.eq.s32.totalorder %s26, 1
      %p128 = por %p126, %p127
      %p129 = scmp.ne.s32.totalorder %s120, %s121
      %p130 = scmp.eq.s32.totalorder %s26, 0
      %p131 = por %p129, %p130
      %p132 = scmp.ne.s32.totalorder %s120, %s121
      %p133 = scmp.eq.s32.totalorder %s27, 1
      %p134 = por %p132, %p133
      %p136 = scmp.ne.s32.totalorder %s121, %s135
      %p137 = scmp.eq.s32.totalorder %s27, 0
      %p138 = por %p136, %p137
      %s140 = sadd.s32 %s139, 1
      %p143 = scmp.eq.s32.totalorder %s21, 1
      %p144 = scmp.ne.s32.totalorder %s139, %s141
      %p145 = scmp.eq.s32.totalorder %s21, 0
      %p146 = por %p144, %p145
      %p147 = scmp.ne.s32.totalorder %s139, %s141
      %p148 = scmp.eq.s32.totalorder %s26, 1
      %p149 = por %p147, %p148
      %p150 = scmp.ne.s32.totalorder %s141, %s142
      %p151 = scmp.eq.s32.totalorder %s26, 0
      %p152 = por %p150, %p151
      %p153 = scmp.ne.s32.totalorder %s141, %s142
      %p154 = scmp.eq.s32.totalorder %s27, 1
      %p155 = por %p153, %p154
      %p157 = scmp.ne.s32.totalorder %s142, %s156
      %p158 = scmp.eq.s32.totalorder %s27, 0
      %p159 = por %p157, %p158
      %s161 = sadd.s32 %s160, 1
      %p164 = scmp.eq.s32.totalorder %s21, 1
      %p165 = scmp.ne.s32.totalorder %s160, %s162
      %p166 = scmp.eq.s32.totalorder %s21, 0
      %p167 = por %p165, %p166
      %p168 = scmp.ne.s32.totalorder %s160, %s162
      %p169 = scmp.eq.s32.totalorder %s26, 1
      %p170 = por %p168, %p169
      %p171 = scmp.ne.s32.totalorder %s162, %s163
      %p172 = scmp.eq.s32.totalorder %s26, 0
      %p173 = por %p171, %p172
      %p174 = scmp.ne.s32.totalorder %s162, %s163
      %p175 = scmp.eq.s32.totalorder %s27, 1
      %p176 = por %p174, %p175
      %p178 = scmp.ne.s32.totalorder %s163, %s177
      %p179 = scmp.eq.s32.totalorder %s27, 0
      %p180 = por %p178, %p179
      %s181 = ssub.s32 %s21, %s28
      %p182 = scmp.eq.s32.totalorder %s181, 0
      %s184 = sadd.s32 %s183, 1
      %s185 = scalar_select %p182, %s183, %s184
      %p188 = pneg %p182
      %p189 = scmp.eq.s32.totalorder %s21, 1
      %p190 = por %p188, %p189
      %p191 = scmp.ne.s32.totalorder %s183, %s186
      %p192 = scmp.eq.s32.totalorder %s21, 0
      %p193 = por %p191, %p192
      %p194 = scmp.ne.s32.totalorder %s183, %s186
      %p195 = scmp.eq.s32.totalorder %s26, 1
      %p196 = por %p194, %p195
      %p197 = scmp.ne.s32.totalorder %s186, %s187
      %p198 = scmp.eq.s32.totalorder %s26, 0
      %p199 = por %p197, %p198
      %p200 = scmp.ne.s32.totalorder %s186, %s187
      %p201 = scmp.eq.s32.totalorder %s27, 1
      %p202 = por %p200, %p201
      %p204 = scmp.ne.s32.totalorder %s187, %s203
      %p205 = scmp.eq.s32.totalorder %s27, 0
      %p206 = por %p204, %p205
      %p207 = scmp.le.s32.totalorder 1, %s21
      %p208 = scmp.lt.s32.totalorder %s21, 3
      %p209 = pnand %p207, %p208
      %p210 = pneg %p209
      // Predicated region
      $region9: #{tpu_custom_call.1} parent=5 // pred_check
        _
      $region10: #{tpu_custom_call.1} parent=5 // pred_check_branch
        %212 = sbr.rel (%p209) target = $region12
      $region11: #{tpu_custom_call.1} parent=5 // pred_region
        %s213 = ssub.s32 %s21, 1
        // Predicated region
        $region13: #{tpu_custom_call.1} parent=11 // pred_check
          %p214 = pneg %p68
        $region14: #{tpu_custom_call.1} parent=11 // pred_check_branch
          %216 = sbr.rel (%p214) target = $region16
        $region15: #{tpu_custom_call.1} parent=11 // pred_region
          %218 = vsyncadd [#allocation6], 0
          %s219 = sshll.u32 %s1, 4
          %s220 = int_to_ptr.hbm [resolvable:$true] %s219
          %s221 = sshll.u32 [#allocation5], 4
          %s222 = int_to_ptr.vmem [resolvable:$true] %s221
          %227 = dma.hbm_to_vmem [thread:$0]  %s220, 512, %s222, [#allocation6], 128, 128, 8
        $region16: #{tpu_custom_call.1} parent=11 // pred_fallthru
          _
        // Predicated region
        $region17: #{tpu_custom_call.1} parent=11 // pred_check
          %p228 = pneg %p89
        $region18: #{tpu_custom_call.1} parent=11 // pred_check_branch
          %230 = sbr.rel (%p228) target = $region20
        $region19: #{tpu_custom_call.1} parent=11 // pred_region
          _
        $region20: #{tpu_custom_call.1} parent=11 // pred_fallthru
          _
        // Predicated region
        $region21: #{tpu_custom_call.1} parent=11 // pred_check
          %p231 = pneg %p110
        $region22: #{tpu_custom_call.1} parent=11 // pred_check_branch
          %233 = sbr.rel (%p231) target = $region24
        $region23: #{tpu_custom_call.1} parent=11 // pred_region
          %235 = vsyncadd [#allocation6], 0
          %s236 = sshll.u32 %s3, 4
          %s237 = int_to_ptr.hbm [resolvable:$true] %s236
          %s238 = sshll.u32 [#allocation7], 4
          %s239 = int_to_ptr.vmem [resolvable:$true] %s238
          %244 = dma.hbm_to_vmem [thread:$0]  %s237, 2048, %s239, [#allocation6], 128, 128, 8
        $region24: #{tpu_custom_call.1} parent=11 // pred_fallthru
          _
        // Predicated region
        $region25: #{tpu_custom_call.1} parent=11 // pred_check
          %p245 = pneg %p131
        $region26: #{tpu_custom_call.1} parent=11 // pred_check_branch
          %247 = sbr.rel (%p245) target = $region28
        $region27: #{tpu_custom_call.1} parent=11 // pred_region
          _
        $region28: #{tpu_custom_call.1} parent=11 // pred_fallthru
          _
        // Predicated region
        $region29: #{tpu_custom_call.1} parent=11 // pred_check
          %p248 = pneg %p152
        $region30: #{tpu_custom_call.1} parent=11 // pred_check_branch
          %250 = sbr.rel (%p248) target = $region32
        $region31: #{tpu_custom_call.1} parent=11 // pred_region
          %252 = vsyncadd [#allocation9], 0
          %s253 = sshll.u32 %s5, 4
          %s254 = int_to_ptr.hbm [resolvable:$true] %s253
          %s255 = sshll.u32 [#allocation8], 4
          %s256 = int_to_ptr.vmem [resolvable:$true] %s255
          %261 = dma.hbm_to_vmem [thread:$0]  %s254, 2048, %s256, [#allocation9], 128, 128, 8
        $region32: #{tpu_custom_call.1} parent=11 // pred_fallthru
          _
        // Predicated region
        $region33: #{tpu_custom_call.1} parent=11 // pred_check
          %p262 = pneg %p173
        $region34: #{tpu_custom_call.1} parent=11 // pred_check_branch
          %264 = sbr.rel (%p262) target = $region36
        $region35: #{tpu_custom_call.1} parent=11 // pred_region
          _
        $region36: #{tpu_custom_call.1} parent=11 // pred_fallthru
          _
      $region12: #{tpu_custom_call.1} parent=5 // pred_fallthru
        _
      %p265 = scmp.lt.s32.totalorder %s21, 2
      // Predicated region
      $region37: #{tpu_custom_call.1} parent=5 // pred_check
        %p266 = pneg %p265
      $region38: #{tpu_custom_call.1} parent=5 // pred_check_branch
        %268 = sbr.rel (%p266) target = $region40
      $region39: #{tpu_custom_call.1} parent=5 // pred_region
        // Predicated region
        $region41: #{tpu_custom_call.1} parent=39 // pred_check
          %p269 = pneg %p41
        $region42: #{tpu_custom_call.1} parent=39 // pred_check_branch
          %271 = sbr.rel (%p269) target = $region44
        $region43: #{tpu_custom_call.1} parent=39 // pred_region
          %s272 = sand.u32 %s31, 1
          %s273 = scalar_lea.sflag [#allocation3], %s272
          %s274 = sand.u32 %s31, 1
          %s275 = smul.addr %s274, 8
          %s276 = scalar_lea.vmem [#allocation2], %s275
          %278 = vsyncadd %s273, 0
          %s279 = smul.addr %s21, 8
          %s280 = scalar_lea.hbm %s0, %s279
          %s282 = sshll.u32 %s280, 4
          %s283 = int_to_ptr.hbm [resolvable:$true] %s282
          %s284 = sshll.u32 %s276, 4
          %s285 = int_to_ptr.vmem [resolvable:$true] %s284
          %287 = dma.hbm_to_vmem [thread:$0]  %s283, 128, %s285, %s273
        $region44: #{tpu_custom_call.1} parent=39 // pred_fallthru
          _
      $region40: #{tpu_custom_call.1} parent=5 // pred_fallthru
        _
      %p288 = scmp.le.s32.totalorder 1, %s21
      %p289 = scmp.lt.s32.totalorder %s21, 3
      %p290 = pnand %p288, %p289
      %p291 = pneg %p290
      // Predicated region
      $region45: #{tpu_custom_call.1} parent=5 // pred_check
        _
      $region46: #{tpu_custom_call.1} parent=5 // pred_check_branch
        %293 = sbr.rel (%p290) target = $region48
      $region47: #{tpu_custom_call.1} parent=5 // pred_region
        %s294 = ssub.s32 %s21, 1
        %s295 = sand.u32 %s34, 1
        %s296 = scalar_lea.sflag [#allocation3], %s295
        %s297 = sand.u32 %s34, 1
        %s298 = smul.addr %s297, 8
        %s299 = scalar_lea.vmem [#allocation2], %s298
        // Predicated region
        $region49: #{tpu_custom_call.1} parent=47 // pred_check
          %p300 = pneg %p47
        $region50: #{tpu_custom_call.1} parent=47 // pred_check_branch
          %302 = sbr.rel (%p300) target = $region52
        $region51: #{tpu_custom_call.1} parent=47 // pred_region
          %304 = dma.done %s296, 128
        $region52: #{tpu_custom_call.1} parent=47 // pred_fallthru
          _
        // Predicated region
        $region53: #{tpu_custom_call.1} parent=47 // pred_check
          %p305 = pneg %p68
        $region54: #{tpu_custom_call.1} parent=47 // pred_check_branch
          %307 = sbr.rel (%p305) target = $region56
        $region55: #{tpu_custom_call.1} parent=47 // pred_region
          %309 = dma.done [#allocation6], 512
        $region56: #{tpu_custom_call.1} parent=47 // pred_fallthru
          _
        // Predicated region
        $region57: #{tpu_custom_call.1} parent=47 // pred_check
          %p310 = pneg %p110
        $region58: #{tpu_custom_call.1} parent=47 // pred_check_branch
          %312 = sbr.rel (%p310) target = $region60
        $region59: #{tpu_custom_call.1} parent=47 // pred_region
          %314 = dma.done [#allocation6], 2048
        $region60: #{tpu_custom_call.1} parent=47 // pred_fallthru
          _
        // Predicated region
        $region61: #{tpu_custom_call.1} parent=47 // pred_check
          %p315 = pneg %p152
        $region62: #{tpu_custom_call.1} parent=47 // pred_check_branch
          %317 = sbr.rel (%p315) target = $region64
        $region63: #{tpu_custom_call.1} parent=47 // pred_region
          %319 = dma.done [#allocation9], 2048
        $region64: #{tpu_custom_call.1} parent=47 // pred_fallthru
          _
        %s320 = sand.u32 %s34, 1
        %s321 = scalar_lea.sflag [#allocation3], %s320
        %s322 = sand.u32 %s34, 1
        %s323 = smul.addr %s322, 8
        %s324 = scalar_lea.vmem [#allocation2], %s323
        %p325 = pneg %p47
        %p326 = pneg %p44
        %p327 = pneg %p68
        %p328 = pneg %p65
        %p329 = pneg %p89
        %p330 = pneg %p86
        %p331 = pneg %p110
        %p332 = pneg %p107
        %p333 = pneg %p131
        %p334 = pneg %p128
        %p335 = pneg %p152
        %p336 = pneg %p149
        %p337 = pneg %p173
        %p338 = pneg %p170
        %p339 = pneg %p199
        %p340 = pneg %p196
        %s341 = sand.u32 %s186, 1
        %s342 = scalar_lea.sflag [#allocation4], %s341
        %s343 = sand.u32 %s186, 1
        %s344 = smul.addr %s343, 8
        %s345 = scalar_lea.vmem [#allocation10], %s344
        %v346 = vld [vmem:[%s299] sm:$0xff]
        %v347 = vld [vmem:[#allocation5] sm:$0xff]
        %v348 = vld [vmem:[#allocation5 + $0x8] sm:$0xff]
        %v349 = vld [vmem:[#allocation5 + $0x10] sm:$0xff]
        %v350 = vld [vmem:[#allocation5 + $0x18] sm:$0xff]
        %v351 = vld [vmem:[%s2] sm:$0x1]
        %v353 = vperm.slane %v351, 0
        %vm355 = vcmask 261120
        %v357 = vsel %vm355, %v346, 0
        %359 = vmatpush.msra.mxu0 0.0
        %360 = vmatpush.msra.mxu0 0.0
        %361 = vmatpush.msra.mxu0 0.0
        %362 = vmatpush.msra.mxu0 0.0
        %363 = vmatpush.msra.mxu0 0.0
        %364 = vmatpush.msra.mxu0 0.0
        %365 = vmatpush.msra.mxu0 0.0
        %366 = vmatpush.msra.mxu0 0.0
        %367 = vmatpush.msra.mxu0 0.0
        %368 = vmatpush.msra.mxu0 0.0
        %369 = vmatpush.msra.mxu0 0.0
        %370 = vmatpush.msra.mxu0 0.0
        %371 = vmatpush.msra.mxu0 %v350
        %372 = vmatpush.msra.mxu0 %v349
        %373 = vmatpush.msra.mxu0 %v348
        %374 = vmatpush.msra.mxu0 %v347
        %375 = vmatmul.f32.gmra.mxu0 %v357
        %v376 = vpop.f32.mrf.mxu0
        %v377 = vadd.f32 %v353, %v376
        %378 = vdwg.mxu0
        %v379 = vmax.f32 %v377, 0.0
        %v380 = vld [vmem:[#allocation7] sm:$0xff]
        %v381 = vld [vmem:[#allocation7 + $0x8] sm:$0xff]
        %v382 = vld [vmem:[#allocation7 + $0x10] sm:$0xff]
        %v383 = vld [vmem:[#allocation7 + $0x18] sm:$0xff]
        %v384 = vld [vmem:[#allocation7 + $0x20] sm:$0xff]
        %v385 = vld [vmem:[#allocation7 + $0x28] sm:$0xff]
        %v386 = vld [vmem:[#allocation7 + $0x30] sm:$0xff]
        %v387 = vld [vmem:[#allocation7 + $0x38] sm:$0xff]
        %v388 = vld [vmem:[#allocation7 + $0x40] sm:$0xff]
        %v389 = vld [vmem:[#allocation7 + $0x48] sm:$0xff]
        %v390 = vld [vmem:[#allocation7 + $0x50] sm:$0xff]
        %v391 = vld [vmem:[#allocation7 + $0x58] sm:$0xff]
        %v392 = vld [vmem:[#allocation7 + $0x60] sm:$0xff]
        %v393 = vld [vmem:[#allocation7 + $0x68] sm:$0xff]
        %v394 = vld [vmem:[#allocation7 + $0x70] sm:$0xff]
        %v395 = vld [vmem:[#allocation7 + $0x78] sm:$0xff]
        %v396 = vld [vmem:[%s4] sm:$0x1]
        %v398 = vperm.slane %v396, 0
        %400 = vmatpush.msra.mxu0 %v395
        %401 = vmatpush.msra.mxu0 %v394
        %402 = vmatpush.msra.mxu0 %v393
        %403 = vmatpush.msra.mxu0 %v392
        %404 = vmatpush.msra.mxu0 %v391
        %405 = vmatpush.msra.mxu0 %v390
        %406 = vmatpush.msra.mxu0 %v389
        %407 = vmatpush.msra.mxu0 %v388
        %408 = vmatpush.msra.mxu0 %v387
        %409 = vmatpush.msra.mxu0 %v386
        %410 = vmatpush.msra.mxu0 %v385
        %411 = vmatpush.msra.mxu0 %v384
        %412 = vmatpush.msra.mxu0 %v383
        %413 = vmatpush.msra.mxu0 %v382
        %414 = vmatpush.msra.mxu0 %v381
        %415 = vmatpush.msra.mxu0 %v380
        %416 = vmatmul.f32.gmra.mxu0 %v379
        %v417 = vpop.f32.mrf.mxu0
        %v418 = vadd.f32 %v398, %v417
        %419 = vdwg.mxu0
        %v420 = vmax.f32 %v418, 0.0
        %v421 = vld [vmem:[#allocation8] sm:$0xff]
        %v422 = vld [vmem:[#allocation8 + $0x8] sm:$0xff]
        %v423 = vld [vmem:[#allocation8 + $0x10] sm:$0xff]
        %v424 = vld [vmem:[#allocation8 + $0x18] sm:$0xff]
        %v425 = vld [vmem:[#allocation8 + $0x20] sm:$0xff]
        %v426 = vld [vmem:[#allocation8 + $0x28] sm:$0xff]
        %v427 = vld [vmem:[#allocation8 + $0x30] sm:$0xff]
        %v428 = vld [vmem:[#allocation8 + $0x38] sm:$0xff]
        %v429 = vld [vmem:[#allocation8 + $0x40] sm:$0xff]
        %v430 = vld [vmem:[#allocation8 + $0x48] sm:$0xff]
        %v431 = vld [vmem:[#allocation8 + $0x50] sm:$0xff]
        %v432 = vld [vmem:[#allocation8 + $0x58] sm:$0xff]
        %v433 = vld [vmem:[#allocation8 + $0x60] sm:$0xff]
        %v434 = vld [vmem:[#allocation8 + $0x68] sm:$0xff]
        %v435 = vld [vmem:[#allocation8 + $0x70] sm:$0xff]
        %v436 = vld [vmem:[#allocation8 + $0x78] sm:$0xff]
        %v437 = vld [vmem:[%s6] sm:$0x1]
        %v439 = vperm.slane %v437, 0
        %441 = vmatpush.msra.mxu0 %v436
        %442 = vmatpush.msra.mxu0 %v435
        %443 = vmatpush.msra.mxu0 %v434
        %444 = vmatpush.msra.mxu0 %v433
        %445 = vmatpush.msra.mxu0 %v432
        %446 = vmatpush.msra.mxu0 %v431
        %447 = vmatpush.msra.mxu0 %v430
        %448 = vmatpush.msra.mxu0 %v429
        %449 = vmatpush.msra.mxu0 %v428
        %450 = vmatpush.msra.mxu0 %v427
        %451 = vmatpush.msra.mxu0 %v426
        %452 = vmatpush.msra.mxu0 %v425
        %453 = vmatpush.msra.mxu0 %v424
        %454 = vmatpush.msra.mxu0 %v423
        %455 = vmatpush.msra.mxu0 %v422
        %456 = vmatpush.msra.mxu0 %v421
        %457 = vmatmul.f32.gmra.mxu0 %v420
        %v458 = vpop.f32.mrf.mxu0
        %v459 = vadd.f32 %v439, %v458
        %460 = vdwg.mxu0
        %461 = vst [vmem:[%s345] sm:$0xff] %v459
        %s462 = sand.u32 %s186, 1
        %s463 = scalar_lea.sflag [#allocation4], %s462
        %s464 = sand.u32 %s186, 1
        %s465 = smul.addr %s464, 8
        %s466 = scalar_lea.vmem [#allocation10], %s465
        // Predicated region
        $region65: #{tpu_custom_call.1} parent=47 // pred_check
          %p467 = pneg %p196
        $region66: #{tpu_custom_call.1} parent=47 // pred_check_branch
          %469 = sbr.rel (%p467) target = $region68
        $region67: #{tpu_custom_call.1} parent=47 // pred_region
          %471 = vsyncadd %s463, 0
          %s472 = smul.addr %s26, 8
          %s473 = scalar_lea.hbm %s7, %s472
          %s475 = sshll.u32 %s466, 4
          %s476 = int_to_ptr.vmem [resolvable:$true] %s475
          %s477 = sshll.u32 %s473, 4
          %s478 = int_to_ptr.hbm [resolvable:$true] %s477
          %480 = dma.vmem_to_hbm [thread:$0]  %s476, 128, %s478, %s463
        $region68: #{tpu_custom_call.1} parent=47 // pred_fallthru
          _
      $region48: #{tpu_custom_call.1} parent=5 // pred_fallthru
        _
      %p481 = scmp.le.s32.totalorder 2, %s21
      // Predicated region
      $region69: #{tpu_custom_call.1} parent=5 // pred_check
        %p482 = pneg %p481
      $region70: #{tpu_custom_call.1} parent=5 // pred_check_branch
        %484 = sbr.rel (%p482) target = $region72
      $region71: #{tpu_custom_call.1} parent=5 // pred_region
        %s485 = ssub.s32 %s21, 2
        // Predicated region
        $region73: #{tpu_custom_call.1} parent=71 // pred_check
          %p486 = pneg %p202
        $region74: #{tpu_custom_call.1} parent=71 // pred_check_branch
          %488 = sbr.rel (%p486) target = $region76
        $region75: #{tpu_custom_call.1} parent=71 // pred_region
          %s489 = sand.u32 %s187, 1
          %s490 = scalar_lea.sflag [#allocation4], %s489
          %s491 = sand.u32 %s187, 1
          %s492 = smul.addr %s491, 8
          %s493 = scalar_lea.vmem [#allocation10], %s492
          %495 = dma.done %s490, 128
        $region76: #{tpu_custom_call.1} parent=71 // pred_fallthru
          _
      $region72: #{tpu_custom_call.1} parent=5 // pred_fallthru
        _
    $region6: #{tpu_custom_call.1} parent=1 // loop_footer
      %s25 = sadd.s32 1, %s21
    $region7: #{tpu_custom_call.1} parent=1 // loop_footer_branch
      %20 = sbr.rel target = $region3
    $region8: #{tpu_custom_call.1} parent=1 // loop_exit
      _
    %496 = vsyncpa [#allocation3], 1
    %s497 = scalar_lea.sflag [#allocation3], 1
    %498 = vsyncpa %s497, 1
    %499 = vsyncpa [#allocation6], 1
    %500 = vsyncpa [#allocation9], 1
    %501 = vsyncpa [#allocation4], 1
    %s502 = scalar_lea.sflag [#allocation4], 1
    %503 = vsyncpa %s502, 1

</llo_original>
